<compile_context>
chip_gen: v7x
topology: tpu7x:2x2x1
jax: 0.10.0
libtpu: 0.0.40
codegen_flags: <defaults>
</compile_context>

<pallas_src>
from functools import partial
from itertools import combinations

import numpy as np
import jax
import jax.numpy as jnp
from jax.experimental import pallas as pl
from jax.experimental.pallas import tpu as pltpu


# ----------------------- host-side mask / group-id construction (setup glue) --
def make_neg_mask(batch_size, group_size):
    # Faithful NT_Xent_Group_Neg.mask_correlated_samples
    N = 2 * batch_size
    mask = np.ones((N, N), dtype=bool)
    np.fill_diagonal(mask, False)
    for main_index in range(batch_size // group_size):
        grouped = [main_index * group_size + g for g in range(group_size)]
        grouped_aug = grouped + [batch_size + i for i in grouped]
        for a, b in combinations(grouped_aug, 2):
            mask[a, b] = False
            mask[b, a] = False
    return mask


def make_pos_mask(batch_size, group_size, mask_pos=()):
    # Faithful NT_Xent_Group_Pos.get_positive_mask (incl. the "set to 1" no-op)
    N = 2 * batch_size
    mask = np.ones((N, N), dtype=bool)
    np.fill_diagonal(mask, False)
    for main_index in range(batch_size // group_size):
        grouped = [main_index * group_size + g
                   for g in range(group_size) if g not in mask_pos]
        grouped_aug = grouped + [batch_size + i for i in grouped]
        for a, b in combinations(grouped_aug, 2):
            mask[a, b] = True
            mask[b, a] = True
    return mask


def make_group_ids(batch_size, group_size):
    """Per-row group id such that neg_mask[a, b] == (gid[a] != gid[b])."""
    N = 2 * batch_size
    n_groups = batch_size // group_size
    span = n_groups * group_size
    gid = np.empty(N, dtype=np.int32)
    for i in range(batch_size):
        if i < span:
            g = i // group_size
            gid[i] = g
            gid[batch_size + i] = g
        else:
            gid[i] = n_groups + 2 * (i - span)
            gid[batch_size + i] = n_groups + 2 * (i - span) + 1
    return gid


_TARGET_COLS = 128          # pack enough problems that each tile is >=128 lanes wide


def _choose_tile_rows(pack_rows, pack_cols, temp_budget_bytes=16 << 20):
    """Largest row tile (divisor of pack_rows, multiple of 8) whose ~8 live
    (tile, pack_cols) f32 temporaries fit the budget."""
    cap = max(8, temp_budget_bytes // (8 * 4 * max(pack_cols, 1)))
    for d in range(pack_rows, 0, -1):
        if pack_rows % d == 0 and d % 8 == 0 and d <= cap:
            return d
    return pack_rows  # full-extent block is always layout-legal


# ----------------------------------------------------------- Pallas kernel --
def _nt_xent_group_pos_kernel(lhs_ref, rhs_ref, rowmeta_ref, colmeta_ref,
                              out_ref, *, inv_temperature, tile_rows):
    t = pl.program_id(1)

    # Cosine-similarity row tile: rows were L2-normalized in the wrapper, so a
    # plain f32 dot on the MXU gives the cosine similarities directly.
    sim = jax.lax.dot_general(
        lhs_ref[...], rhs_ref[...], (((1,), (1,)), ((), ())),
        preferred_element_type=jnp.float32) * jnp.float32(inv_temperature)
    T, C = sim.shape

    # Metadata: [problem-id, group-id] per packed row (row form and col form).
    rm = rowmeta_ref[...]                       # (T, 2) int32
    cm = colmeta_ref[...]                       # (2, C) int32
    pid_r, gid_r = rm[:, 0:1], rm[:, 1:2]       # (T, 1)
    pid_c, gid_c = cm[0:1, :], cm[1:2, :]       # (1, C)

    same_prob = pid_r == pid_c                  # (T, C) — masks cross-problem pairs
    r_idx = t * tile_rows + jax.lax.broadcasted_iota(jnp.int32, (T, 1), 0)
    c_idx = jax.lax.broadcasted_iota(jnp.int32, (1, C), 1)
    # Positives: every off-diagonal, same-problem entry (valid because the
    # module's get_positive_mask "set to 1" is a no-op -> host-asserted).
    pos = same_prob & (r_idx != c_idx)
    # Negatives: same problem, different group id.
    neg = same_prob & (gid_r != gid_c)

    # Fused masked log-sum-exp cross-entropy (shift-invariant; |sim| <= 1/temp
    # so exp never under/overflows -> no extra clamps needed).
    m = jnp.max(sim, axis=-1, keepdims=True)                 # (T, 1)
    shifted = sim - m                                        # (T, C)
    e = jnp.exp(shifted)                                     # (T, C)
    s_neg = jnp.sum(jnp.where(neg, e, 0.0), axis=-1, keepdims=True)   # (T, 1)
    # NOTE: when the positive column also has a different group id it appears
    # in s_neg as well, so e + s_neg double-counts it.  This exactly matches
    # the PyTorch reference (positive concatenated on top of ALL negatives).
    contrib = jnp.where(pos, jnp.log(e + s_neg) - shifted, 0.0)

    # Per-row loss sums.  The (tile, 1) store is sub-lane but negligible
    # (tile*4 bytes/step) next to the (tile, C) exp/log work.
    out_ref[...] = jnp.sum(contrib, axis=-1, keepdims=True)


# ----------------------------------------------------------------- wrapper --
def nt_xent_group_pos_loss_batched(z_i, z_j, group_ids, num_pos, temperature=0.5):
    """Per-problem NT_Xent_Group_Pos losses for P independent minibatches.

    z_i, z_j: (P, B, D).  Returns (P,) float32 losses, each identical to the
    torch module's scalar loss for that minibatch.
    """
    z_i = jnp.asarray(z_i, jnp.float32)
    z_j = jnp.asarray(z_j, jnp.float32)
    assert z_i.ndim == 3 and z_i.shape == z_j.shape
    P, B, D = z_i.shape
    N = 2 * B

    # --- normalize ONCE in the wrapper (f32, O(P*N*D), fused by XLA).
    # eps matches nn.CosineSimilarity's 1e-8 norm clamp (squared -> 1e-16).
    z = jnp.concatenate([z_i, z_j], axis=1)                  # (P, N, D)
    zn = z * jax.lax.rsqrt(
        jnp.maximum(jnp.sum(z * z, axis=-1, keepdims=True), 1e-16))

    # --- block-diagonal packing: P_pack problems per pack so each sim tile is
    # >= _TARGET_COLS lanes wide.  Padded problem slots (zeros) only interact
    # with themselves (distinct pack-local slot id) and their rows are dropped.
    P_pack = max(1, min(P, -(-_TARGET_COLS // N)))
    num_packs = -(-P // P_pack)
    pad = num_packs * P_pack - P
    if pad:
        zn = jnp.concatenate([zn, jnp.zeros((pad, N, D), jnp.float32)], axis=0)
    pack_rows = P_pack * N
    pack_cols = pack_rows
    zn_packed = zn.reshape(num_packs, pack_rows, D)

    # --- per-row metadata (identical for every pack): pack-local problem slot
    # id and local group id.
    gid = np.asarray(group_ids, np.int32).reshape(N)
    pid_vec = np.repeat(np.arange(P_pack, dtype=np.int32), N)    # (pack_rows,)
    gid_vec = np.tile(gid, P_pack)                               # (pack_rows,)
    row_meta = jnp.asarray(np.stack([pid_vec, gid_vec], axis=1)) # (pack_rows, 2)
    col_meta = jnp.asarray(np.stack([pid_vec, gid_vec], axis=0)) # (2, pack_cols)

    tile_rows = _choose_tile_rows(pack_rows, pack_cols)
    num_row_tiles = pack_rows // tile_rows

    kernel = partial(_nt_xent_group_pos_kernel,
                     inv_temperature=float(1.0 / temperature),
                     tile_rows=tile_rows)

    # VMEM: double-buffered blocks + ~8 live (tile, C) f32 temporaries.
    est_bytes = (2 * (tile_rows * D + pack_rows * D + tile_rows * 2
                      + 2 * pack_cols + tile_rows) * 4
                 + 8 * tile_rows * pack_cols * 4)
    vmem_limit = int(min(32 << 20, max(8 << 20, 2 * est_bytes)))  # v7x-safe cap

    elems = num_packs * pack_rows * pack_cols
    cost = pl.CostEstimate(
        flops=2 * elems * D + 10 * elems,
        transcendentals=2 * elems,
        bytes_accessed=(2 * num_packs * pack_rows * D * 4
                        + num_packs * pack_rows * 4
                        + (pack_rows * 2 + 2 * pack_cols) * 4))

    row_sums = pl.pallas_call(
        kernel,
        out_shape=jax.ShapeDtypeStruct((num_packs, pack_rows, 1), jnp.float32),
        grid_spec=pltpu.PrefetchScalarGridSpec(
            num_scalar_prefetch=0,
            grid=(num_packs, num_row_tiles),
            in_specs=[
                pl.BlockSpec((None, tile_rows, D), lambda p, t: (p, t, 0)),   # lhs tile
                pl.BlockSpec((None, pack_rows, D), lambda p, t: (p, 0, 0)),   # rhs (pack resident)
                pl.BlockSpec((tile_rows, 2), lambda p, t: (t, 0)),            # row meta
                pl.BlockSpec((2, pack_cols), lambda p, t: (0, 0)),            # col meta (resident)
            ],
            out_specs=pl.BlockSpec((None, tile_rows, 1), lambda p, t: (p, t, 0)),
        ),
        compiler_params=pltpu.CompilerParams(
            dimension_semantics=("parallel", "parallel"),
            vmem_limit_bytes=vmem_limit),
        cost_estimate=cost,
    )(zn_packed, zn_packed, row_meta, col_meta)

    per_row = row_sums.reshape(num_packs * pack_rows)[: P * N].reshape(P, N)
    scale = 1.0 / (float(N) * float(num_pos))
    return jnp.sum(per_row, axis=1) * jnp.float32(scale)


def nt_xent_group_pos_loss(z_i, z_j, group_ids, num_pos, temperature=0.5):
    """Single-minibatch scalar loss (same API/semantics as the torch module)."""
    losses = nt_xent_group_pos_loss_batched(
        jnp.asarray(z_i)[None], jnp.asarray(z_j)[None],
        group_ids, num_pos, temperature)
    return losses[0]


# ----------------------------------------------------- numpy reference check --
def _ref_loss(z_i, z_j, pos_mask, neg_mask, temperature):
    z = np.concatenate([z_i, z_j], axis=0).astype(np.float64)
    zn = z / np.maximum(np.linalg.norm(z, axis=1, keepdims=True), 1e-8)
    sim = zn @ zn.T / temperature
    N = z.shape[0]
    pos = sim[pos_mask].reshape(N, -1)
    neg = sim[neg_mask].reshape(N, -1)
    loss = 0.0
    for p in range(pos.shape[1]):
        logits = np.concatenate([pos[:, p:p + 1], neg], axis=1)
        m = logits.max(axis=1, keepdims=True)
        lse = np.log(np.exp(logits - m).sum(axis=1)) + m[:, 0]
        loss += np.sum(lse - logits[:, 0])
    return loss / (N * pos.shape[1])


if __name__ == "__main__":
    # Module config: batch_size=8, temperature=0.5, use_patient=True -> group_size=2
    batch_size = 8
    feat_dim = 32
    temperature = 0.5
    group_size = 2          # 1 + int(use_patient)
    mask_pos = ()
    num_problems = 16       # batched independent minibatches in one pallas_call

    neg_mask_np = make_neg_mask(batch_size, group_size)
    pos_mask_np = make_pos_mask(batch_size, group_size, mask_pos)
    gid_np = make_group_ids(batch_size, group_size)

    # The in-kernel mask generation must reproduce the faithful torch masks.
    N = 2 * batch_size
    assert np.array_equal(neg_mask_np, gid_np[:, None] != gid_np[None, :])
    assert np.array_equal(pos_mask_np, ~np.eye(N, dtype=bool))
    row_pos = pos_mask_np.sum(axis=1)
    assert np.all(row_pos == row_pos[0])
    num_pos = int(row_pos[0])

    key = jax.random.PRNGKey(0)
    k1, k2 = jax.random.split(key)
    z_i = jax.random.normal(k1, (num_problems, batch_size, feat_dim), jnp.float32)
    z_j = jax.random.normal(k2, (num_problems, batch_size, feat_dim), jnp.float32)

    losses = nt_xent_group_pos_loss_batched(z_i, z_j, gid_np, num_pos, temperature)
    losses = jax.block_until_ready(losses)

    zi_np, zj_np = np.asarray(z_i), np.asarray(z_j)
    refs = np.array([_ref_loss(zi_np[p], zj_np[p], pos_mask_np, neg_mask_np, temperature)
                     for p in range(num_problems)])
    assert np.allclose(np.asarray(losses), refs, rtol=5e-4, atol=5e-4), (
        np.asarray(losses), refs)

    # Single-minibatch path (scalar, matches the torch module's forward).
    loss0 = nt_xent_group_pos_loss(zi_np[0], zj_np[0], gid_np, num_pos, temperature)
    loss0 = jax.block_until_ready(loss0)
    assert np.allclose(float(loss0), refs[0], rtol=5e-4, atol=5e-4), (float(loss0), refs[0])

    print("KERNEL_OK")
</pallas_src>

<mosaic_0001>
module attributes {stable_mosaic.version = 11 : i64} {
  func.func @_nt_xent_group_pos_kernel(%arg0: i32, %arg1: i32, %arg2: memref<1x128x32xf32, #tpu.memory_space<vmem>>, %arg3: memref<1x128x32xf32, #tpu.memory_space<vmem>>, %arg4: memref<128x2xi32, #tpu.memory_space<vmem>>, %arg5: memref<2x128xi32, #tpu.memory_space<vmem>>, %arg6: memref<1x128x1xf32, #tpu.memory_space<vmem>>) attributes {dimension_semantics = [#tpu.dimension_semantics<parallel>, #tpu.dimension_semantics<parallel>], iteration_bounds = array<i64: 2, 1>, scalar_prefetch = 0 : i64, scratch_operands = 0 : i64, tpu.core_type = #tpu.core_type<tc>, window_params = [{transform_indices = @transform_0, window_bounds = array<i64: 1, 128, 32>}, {transform_indices = @transform_1, window_bounds = array<i64: 1, 128, 32>}, {transform_indices = @transform_2, window_bounds = array<i64: 128, 2>}, {pipeline_mode = #tpu.pipeline_mode<synchronous>, transform_indices = @transform_3, window_bounds = array<i64: 2, 128>}, {transform_indices = @transform_4, window_bounds = array<i64: 1, 128, 1>}]} {
    %c0 = arith.constant 0 : index
    %c0_0 = arith.constant 0 : index
    %c0_1 = arith.constant 0 : index
    %0 = vector.load %arg2[%c0, %c0_0, %c0_1] : memref<1x128x32xf32, #tpu.memory_space<vmem>>, vector<1x128x32xf32>
    %1 = vector.shape_cast %0 : vector<1x128x32xf32> to vector<128x32xf32>
    %c0_2 = arith.constant 0 : index
    %c0_3 = arith.constant 0 : index
    %c0_4 = arith.constant 0 : index
    %2 = vector.load %arg3[%c0_2, %c0_3, %c0_4] : memref<1x128x32xf32, #tpu.memory_space<vmem>>, vector<1x128x32xf32>
    %3 = vector.shape_cast %2 : vector<1x128x32xf32> to vector<128x32xf32>
    %cst = arith.constant dense<0.000000e+00> : vector<128x128xf32>
    %4 = tpu.matmul %1, %3, %cst {dimension_numbers = #tpu.dot_dimension_numbers<[1], [1], [0], [0], [0, 0, 1, 0], [], []>} : vector<128x32xf32>, vector<128x32xf32>, vector<128x128xf32> -> vector<128x128xf32>
    %cst_5 = arith.constant 2.000000e+00 : f32
    %5 = vector.broadcast %cst_5 : f32 to vector<128x128xf32>
    %6 = arith.mulf %4, %5 : vector<128x128xf32>
    %c0_6 = arith.constant 0 : index
    %c0_7 = arith.constant 0 : index
    %7 = vector.load %arg4[%c0_6, %c0_7] : memref<128x2xi32, #tpu.memory_space<vmem>>, vector<128x2xi32>
    %c0_8 = arith.constant 0 : index
    %c0_9 = arith.constant 0 : index
    %8 = vector.load %arg5[%c0_8, %c0_9] : memref<2x128xi32, #tpu.memory_space<vmem>>, vector<2x128xi32>
    %9 = vector.extract_strided_slice %7 {offsets = [0, 0], sizes = [128, 1], strides = [1, 1]} : vector<128x2xi32> to vector<128x1xi32>
    %10 = vector.extract_strided_slice %7 {offsets = [0, 1], sizes = [128, 1], strides = [1, 1]} : vector<128x2xi32> to vector<128x1xi32>
    %11 = vector.extract_strided_slice %8 {offsets = [0, 0], sizes = [1, 128], strides = [1, 1]} : vector<2x128xi32> to vector<1x128xi32>
    %12 = vector.extract_strided_slice %8 {offsets = [1, 0], sizes = [1, 128], strides = [1, 1]} : vector<2x128xi32> to vector<1x128xi32>
    %13 = vector.broadcast %9 : vector<128x1xi32> to vector<128x128xi32>
    %14 = vector.broadcast %11 : vector<1x128xi32> to vector<128x128xi32>
    %15 = arith.cmpi eq, %13, %14 : vector<128x128xi32>
    %c128_i32 = arith.constant 128 : i32
    %16 = arith.muli %arg1, %c128_i32 : i32
    %17 = tpu.iota {dimensions = array<i32: 0>} : vector<128x1xi32>
    %18 = vector.broadcast %16 : i32 to vector<128x1xi32>
    %19 = arith.addi %18, %17 : vector<128x1xi32>
    %20 = tpu.iota {dimensions = array<i32: 1>} : vector<1x128xi32>
    %21 = vector.broadcast %19 : vector<128x1xi32> to vector<128x128xi32>
    %22 = vector.broadcast %20 : vector<1x128xi32> to vector<128x128xi32>
    %23 = arith.cmpi ne, %21, %22 : vector<128x128xi32>
    %24 = arith.andi %15, %23 : vector<128x128xi1>
    %25 = vector.broadcast %10 : vector<128x1xi32> to vector<128x128xi32>
    %26 = vector.broadcast %12 : vector<1x128xi32> to vector<128x128xi32>
    %27 = arith.cmpi ne, %25, %26 : vector<128x128xi32>
    %28 = arith.andi %15, %27 : vector<128x128xi1>
    %cst_10 = arith.constant dense<0xFF800000> : vector<128xf32>
    %29 = vector.multi_reduction <maximumf>, %6, %cst_10 [1] : vector<128x128xf32> to vector<128xf32>
    %30 = vector.shape_cast %29 : vector<128xf32> to vector<128x1xf32>
    %31 = vector.broadcast %30 : vector<128x1xf32> to vector<128x128xf32>
    %32 = arith.subf %6, %31 : vector<128x128xf32>
    %33 = math.exp %32 : vector<128x128xf32>
    %cst_11 = arith.constant 0.000000e+00 : f32
    %34 = vector.broadcast %cst_11 : f32 to vector<128x128xf32>
    %35 = arith.select %28, %33, %34 : vector<128x128xi1>, vector<128x128xf32>
    %cst_12 = arith.constant dense<0.000000e+00> : vector<128xf32>
    %36 = vector.multi_reduction <add>, %35, %cst_12 [1] : vector<128x128xf32> to vector<128xf32>
    %37 = vector.shape_cast %36 : vector<128xf32> to vector<128x1xf32>
    %38 = vector.broadcast %37 : vector<128x1xf32> to vector<128x128xf32>
    %39 = arith.addf %33, %38 : vector<128x128xf32>
    %40 = math.log %39 : vector<128x128xf32>
    %41 = arith.subf %40, %32 : vector<128x128xf32>
    %cst_13 = arith.constant 0.000000e+00 : f32
    %42 = vector.broadcast %cst_13 : f32 to vector<128x128xf32>
    %43 = arith.select %24, %41, %42 : vector<128x128xi1>, vector<128x128xf32>
    %cst_14 = arith.constant dense<0.000000e+00> : vector<128xf32>
    %44 = vector.multi_reduction <add>, %43, %cst_14 [1] : vector<128x128xf32> to vector<128xf32>
    %45 = vector.shape_cast %44 : vector<128xf32> to vector<128x1xf32>
    %c0_15 = arith.constant 0 : index
    %c0_16 = arith.constant 0 : index
    %c0_17 = arith.constant 0 : index
    %46 = vector.load %arg6[%c0_15, %c0_16, %c0_17] : memref<1x128x1xf32, #tpu.memory_space<vmem>>, vector<1x128x1xf32>
    %47 = vector.shape_cast %46 : vector<1x128x1xf32> to vector<128x1xf32>
    %48 = vector.shape_cast %45 : vector<128x1xf32> to vector<1x128x1xf32>
    tpu.vector_store %arg6[%c0_15, %c0_16, %c0_17], %48 {strides = array<i32>} : memref<1x128x1xf32, #tpu.memory_space<vmem>>, vector<1x128x1xf32>,
    return
  }
  func.func @transform_0(%arg0: i32, %arg1: i32) -> (i32, i32, i32) {
    %c0_i32 = arith.constant 0 : i32
    %c0_i32_0 = arith.constant 0 : i32
    return %arg0, %arg1, %c0_i32 : i32, i32, i32
  }
  func.func @transform_1(%arg0: i32, %arg1: i32) -> (i32, i32, i32) {
    %c0_i32 = arith.constant 0 : i32
    %c0_i32_0 = arith.constant 0 : i32
    %c0_i32_1 = arith.constant 0 : i32
    return %arg0, %c0_i32, %c0_i32_0 : i32, i32, i32
  }
  func.func @transform_2(%arg0: i32, %arg1: i32) -> (i32, i32) {
    %c0_i32 = arith.constant 0 : i32
    %c0_i32_0 = arith.constant 0 : i32
    return %arg1, %c0_i32 : i32, i32
  }
  func.func @transform_3(%arg0: i32, %arg1: i32) -> (i32, i32) {
    %c0_i32 = arith.constant 0 : i32
    %c0_i32_0 = arith.constant 0 : i32
    %c0_i32_1 = arith.constant 0 : i32
    return %c0_i32, %c0_i32_0 : i32, i32
  }
  func.func @transform_4(%arg0: i32, %arg1: i32) -> (i32, i32, i32) {
    %c0_i32 = arith.constant 0 : i32
    %c0_i32_0 = arith.constant 0 : i32
    return %arg0, %arg1, %c0_i32 : i32, i32, i32
  }
}

</mosaic_0001>

<llo_original>
// kernel: tpu_custom_call.1
$region0: #{tpu_custom_call.1}
  #allocation0 [shape = 'u32[]', space=smem, size = 0x4, offset = 0x4, fixed_abs, tag = 'smem constant byte address 0x4 - core index']
  #allocation1 [shape = 'u32[144,128]{1,0:T(1,128)}', space=vmem, size = 0x12000, scoped, tag = 'internal scratch']
  %s0 = inlined_call_operand.vmem [shape: f32[2,128,32], index: 0, kind: input, shape index: {}]
  %s1 = inlined_call_operand.vmem [shape: f32[2,128,32], index: 1, kind: input, shape index: {}]
  %s2 = inlined_call_operand.vmem [shape: s32[128,2], index: 2, kind: input, shape index: {}]
  %s3 = inlined_call_operand.vmem [shape: s32[2,128], index: 3, kind: input, shape index: {}]
  %s4 = inlined_call_operand.vmem [shape: f32[2,128,1], index: 4, kind: output, shape index: {}]
  %s5 = sld [smem:[#allocation0]]
  $region49: #{tpu_custom_call.1} parent=0
    _
  %s7 = ssub.s32 1, %s5
  %s8 = scalar_select 0, %s7, %s5
  loop: start=0, step=1, limit=4
  $region2: #{tpu_custom_call.1} parent=0 // loop_pre_header
    _
  $region3: #{tpu_custom_call.1} parent=0 // loop_header
    %s10 = sphi 0, %s14
    %p11 = scmp.ge.s32.totalorder %s10, 4
    %s17 = sphi 0, %s29
    %s18 = sphi 0, %s25
    %s19 = sphi 0, %s17
    %s20 = sphi 0, %s18
    %s21 = sphi 0, %s19
    %s22 = sphi 0, %s20
    %s34 = sphi 0, %s36
    %s37 = sphi 0, %s34
    %s38 = sphi 0, %s37
    %s54 = sphi 0, %s38
    %s60 = sphi 0, %s62
    %s63 = sphi 0, %s60
    %s64 = sphi 0, %s63
    %s80 = sphi 0, %s64
    %s86 = sphi 0, %s88
    %s89 = sphi 0, %s86
    %s90 = sphi 0, %s89
    %s106 = sphi 0, %s90
    %s110 = sphi 0, %s110
    %s112 = sphi 0, %s110
    %s113 = sphi 0, %s112
    %s127 = sphi 0, %s113
    %s135 = sphi 0, %s137
    %s138 = sphi 0, %s135
    %s139 = sphi 0, %s138
    %s155 = sphi 0, %s139
  $region4: #{tpu_custom_call.1} parent=0 // loop_header_branch
    %13 = sbr.rel (%p11) target = $region8
  $region5: #{tpu_custom_call.1} parent=0 // loop_body
    %s15 = ssub.s32 %s10, 1
    %s16 = ssub.s32 %s10, 2
    %s23 = sadd.s32 1, %s18
    %p24 = scmp.ge.s32.totalorder %s23, 1
    %s25 = scalar_select %p24, 0, %s23
    %s26 = sadd.s32 1, %s17
    %s27 = scalar_select %p24, %s26, %s17
    %p28 = scmp.ge.s32.totalorder %s27, 2
    %s29 = scalar_select %p28, 0, %s27
    %s30 = ssub.s32 %s17, %s29
    %s31 = ssub.s32 %s18, %s25
    %s32 = sor.u32 %s30, %s31
    %p33 = scmp.eq.s32.totalorder %s32, 0
    %s35 = sadd.s32 %s34, 1
    %s36 = scalar_select %p33, %s34, %s35
    %p39 = pneg %p33
    %p40 = scmp.eq.s32.totalorder %s10, 1
    %p41 = por %p39, %p40
    %p42 = scmp.ne.s32.totalorder %s34, %s37
    %p43 = scmp.eq.s32.totalorder %s10, 0
    %p44 = por %p42, %p43
    %p45 = scmp.ne.s32.totalorder %s34, %s37
    %p46 = scmp.eq.s32.totalorder %s15, 1
    %p47 = por %p45, %p46
    %p48 = scmp.ne.s32.totalorder %s37, %s38
    %p49 = scmp.eq.s32.totalorder %s15, 0
    %p50 = por %p48, %p49
    %p51 = scmp.ne.s32.totalorder %s37, %s38
    %p52 = scmp.eq.s32.totalorder %s16, 1
    %p53 = por %p51, %p52
    %p55 = scmp.ne.s32.totalorder %s38, %s54
    %p56 = scmp.eq.s32.totalorder %s16, 0
    %p57 = por %p55, %p56
    %s58 = ssub.s32 %s17, %s29
    %p59 = scmp.eq.s32.totalorder %s58, 0
    %s61 = sadd.s32 %s60, 1
    %s62 = scalar_select %p59, %s60, %s61
    %p65 = pneg %p59
    %p66 = scmp.eq.s32.totalorder %s10, 1
    %p67 = por %p65, %p66
    %p68 = scmp.ne.s32.totalorder %s60, %s63
    %p69 = scmp.eq.s32.totalorder %s10, 0
    %p70 = por %p68, %p69
    %p71 = scmp.ne.s32.totalorder %s60, %s63
    %p72 = scmp.eq.s32.totalorder %s15, 1
    %p73 = por %p71, %p72
    %p74 = scmp.ne.s32.totalorder %s63, %s64
    %p75 = scmp.eq.s32.totalorder %s15, 0
    %p76 = por %p74, %p75
    %p77 = scmp.ne.s32.totalorder %s63, %s64
    %p78 = scmp.eq.s32.totalorder %s16, 1
    %p79 = por %p77, %p78
    %p81 = scmp.ne.s32.totalorder %s64, %s80
    %p82 = scmp.eq.s32.totalorder %s16, 0
    %p83 = por %p81, %p82
    %s84 = ssub.s32 %s18, %s25
    %p85 = scmp.eq.s32.totalorder %s84, 0
    %s87 = sadd.s32 %s86, 1
    %s88 = scalar_select %p85, %s86, %s87
    %p91 = pneg %p85
    %p92 = scmp.eq.s32.totalorder %s10, 1
    %p93 = por %p91, %p92
    %p94 = scmp.ne.s32.totalorder %s86, %s89
    %p95 = scmp.eq.s32.totalorder %s10, 0
    %p96 = por %p94, %p95
    %p97 = scmp.ne.s32.totalorder %s86, %s89
    %p98 = scmp.eq.s32.totalorder %s15, 1
    %p99 = por %p97, %p98
    %p100 = scmp.ne.s32.totalorder %s89, %s90
    %p101 = scmp.eq.s32.totalorder %s15, 0
    %p102 = por %p100, %p101
    %p103 = scmp.ne.s32.totalorder %s89, %s90
    %p104 = scmp.eq.s32.totalorder %s16, 1
    %p105 = por %p103, %p104
    %p107 = scmp.ne.s32.totalorder %s90, %s106
    %p108 = scmp.eq.s32.totalorder %s16, 0
    %p109 = por %p107, %p108
    %s111 = sadd.s32 %s110, 1
    %p114 = scmp.eq.s32.totalorder %s10, 1
    %p115 = scmp.ne.s32.totalorder %s110, %s112
    %p116 = scmp.eq.s32.totalorder %s10, 0
    %p117 = por %p115, %p116
    %p118 = scmp.ne.s32.totalorder %s110, %s112
    %p119 = scmp.eq.s32.totalorder %s15, 1
    %p120 = por %p118, %p119
    %p121 = scmp.ne.s32.totalorder %s112, %s113
    %p122 = scmp.eq.s32.totalorder %s15, 0
    %p123 = por %p121, %p122
    %p124 = scmp.ne.s32.totalorder %s112, %s113
    %p125 = scmp.eq.s32.totalorder %s16, 1
    %p126 = por %p124, %p125
    %p128 = scmp.ne.s32.totalorder %s113, %s127
    %p129 = scmp.eq.s32.totalorder %s16, 0
    %p130 = por %p128, %p129
    %s131 = ssub.s32 %s17, %s29
    %s132 = ssub.s32 %s18, %s25
    %s133 = sor.u32 %s131, %s132
    %p134 = scmp.eq.s32.totalorder %s133, 0
    %s136 = sadd.s32 %s135, 1
    %s137 = scalar_select %p134, %s135, %s136
    %p140 = pneg %p134
    %p141 = scmp.eq.s32.totalorder %s10, 1
    %p142 = por %p140, %p141
    %p143 = scmp.ne.s32.totalorder %s135, %s138
    %p144 = scmp.eq.s32.totalorder %s10, 0
    %p145 = por %p143, %p144
    %p146 = scmp.ne.s32.totalorder %s135, %s138
    %p147 = scmp.eq.s32.totalorder %s15, 1
    %p148 = por %p146, %p147
    %p149 = scmp.ne.s32.totalorder %s138, %s139
    %p150 = scmp.eq.s32.totalorder %s15, 0
    %p151 = por %p149, %p150
    %p152 = scmp.ne.s32.totalorder %s138, %s139
    %p153 = scmp.eq.s32.totalorder %s16, 1
    %p154 = por %p152, %p153
    %p156 = scmp.ne.s32.totalorder %s139, %s155
    %p157 = scmp.eq.s32.totalorder %s16, 0
    %p158 = por %p156, %p157
    %p159 = scmp.le.s32.totalorder 1, %s10
    %p160 = scmp.lt.s32.totalorder %s10, 3
    %p161 = pnand %p159, %p160
    %p162 = pneg %p161
    // Predicated region
    $region9: #{tpu_custom_call.1} parent=5 // pred_check
      _
    $region10: #{tpu_custom_call.1} parent=5 // pred_check_branch
      %164 = sbr.rel (%p161) target = $region12
    $region11: #{tpu_custom_call.1} parent=5 // pred_region
      %s165 = ssub.s32 %s10, 1
      // Predicated region
      $region13: #{tpu_custom_call.1} parent=11 // pred_check
        %p166 = pneg %p102
      $region14: #{tpu_custom_call.1} parent=11 // pred_check_branch
        %168 = sbr.rel (%p166) target = $region16
      $region15: #{tpu_custom_call.1} parent=11 // pred_region
        %s169 = smul.u32 16, %s20
        %p170 = scmp.lt.s32.totalorder %s169, 15
        %s171 = scalar_select %p170, %s169, 15
        %s172 = smul.addr %s171, 8
        %s173 = scalar_lea.vmem %s2, %s172
        %s174 = smul.u32 16, %s20
      $region16: #{tpu_custom_call.1} parent=11 // pred_fallthru
        _
      // Predicated region
      $region17: #{tpu_custom_call.1} parent=11 // pred_check
        %p175 = pneg %p123
      $region18: #{tpu_custom_call.1} parent=11 // pred_check_branch
        %177 = sbr.rel (%p175) target = $region20
      $region19: #{tpu_custom_call.1} parent=11 // pred_region
        _
      $region20: #{tpu_custom_call.1} parent=11 // pred_fallthru
        _
    $region12: #{tpu_custom_call.1} parent=5 // pred_fallthru
      _
    %p178 = scmp.lt.s32.totalorder %s10, 2
    // Predicated region
    $region21: #{tpu_custom_call.1} parent=5 // pred_check
      %p179 = pneg %p178
    $region22: #{tpu_custom_call.1} parent=5 // pred_check_branch
      %181 = sbr.rel (%p179) target = $region24
    $region23: #{tpu_custom_call.1} parent=5 // pred_region
      // Predicated region
      $region25: #{tpu_custom_call.1} parent=23 // pred_check
        %p182 = pneg %p44
      $region26: #{tpu_custom_call.1} parent=23 // pred_check_branch
        %184 = sbr.rel (%p182) target = $region28
      $region27: #{tpu_custom_call.1} parent=23 // pred_region
        %s185 = smul.u32 16, %s18
        %p186 = scmp.lt.s32.totalorder %s17, 1
        %s187 = scalar_select %p186, %s17, 1
        %p188 = scmp.lt.s32.totalorder %s185, 15
        %s189 = scalar_select %p188, %s185, 15
        %s190 = smul.addr %s187, 16
        %s191 = sadd.s32 %s189, %s190
        %s192 = smul.addr %s191, 8
        %s193 = scalar_lea.vmem %s0, %s192
        %s194 = smul.u32 16, %s18
      $region28: #{tpu_custom_call.1} parent=23 // pred_fallthru
        _
      // Predicated region
      $region29: #{tpu_custom_call.1} parent=23 // pred_check
        %p195 = pneg %p70
      $region30: #{tpu_custom_call.1} parent=23 // pred_check_branch
        %197 = sbr.rel (%p195) target = $region32
      $region31: #{tpu_custom_call.1} parent=23 // pred_region
        %p198 = scmp.lt.s32.totalorder %s17, 1
        %s199 = scalar_select %p198, %s17, 1
        %s200 = smul.addr %s199, 16
        %s201 = smul.addr %s200, 8
        %s202 = scalar_lea.vmem %s1, %s201
      $region32: #{tpu_custom_call.1} parent=23 // pred_fallthru
        _
    $region24: #{tpu_custom_call.1} parent=5 // pred_fallthru
      _
    %p203 = scmp.le.s32.totalorder 1, %s10
    %p204 = scmp.lt.s32.totalorder %s10, 3
    %p205 = pnand %p203, %p204
    %p206 = pneg %p205
    // Predicated region
    $region33: #{tpu_custom_call.1} parent=5 // pred_check
      _
    $region34: #{tpu_custom_call.1} parent=5 // pred_check_branch
      %208 = sbr.rel (%p205) target = $region36
    $region35: #{tpu_custom_call.1} parent=5 // pred_region
      %s209 = ssub.s32 %s10, 1
      %s210 = smul.u32 16, %s20
      %p211 = scmp.lt.s32.totalorder %s19, 1
      %s212 = scalar_select %p211, %s19, 1
      %p213 = scmp.lt.s32.totalorder %s210, 15
      %s214 = scalar_select %p213, %s210, 15
      %s215 = smul.addr %s212, 16
      %s216 = sadd.s32 %s214, %s215
      %s217 = smul.addr %s216, 8
      %s218 = scalar_lea.vmem %s0, %s217
      %p219 = pneg %p50
      %p220 = pneg %p47
      %p221 = scmp.lt.s32.totalorder %s19, 1
      %s222 = scalar_select %p221, %s19, 1
      %s223 = smul.addr %s222, 16
      %s224 = smul.addr %s223, 8
      %s225 = scalar_lea.vmem %s1, %s224
      %p226 = pneg %p76
      %p227 = pneg %p73
      %s228 = smul.u32 16, %s20
      %p229 = scmp.lt.s32.totalorder %s228, 15
      %s230 = scalar_select %p229, %s228, 15
      %s231 = smul.addr %s230, 8
      %s232 = scalar_lea.vmem %s2, %s231
      %p233 = pneg %p102
      %p234 = pneg %p99
      %p235 = pneg %p123
      %p236 = pneg %p120
      %p237 = pneg %p151
      %p238 = pneg %p148
      %s239 = smul.u32 16, %s20
      %p240 = scmp.lt.s32.totalorder %s19, 1
      %s241 = scalar_select %p240, %s19, 1
      %p242 = scmp.lt.s32.totalorder %s239, 15
      %s243 = scalar_select %p242, %s239, 15
      %s244 = smul.addr %s241, 16
      %s245 = sadd.s32 %s243, %s244
      %s246 = smul.addr %s245, 8
      %s247 = scalar_lea.vmem %s4, %s246
      %s248 = smul.u32 16, %s20
      %p249 = scmp.lt.s32.totalorder %s19, 1
      %s250 = scalar_select %p249, %s19, 1
      %p251 = scmp.lt.s32.totalorder %s248, 15
      %s252 = scalar_select %p251, %s248, 15
      %s253 = smul.addr %s250, 16
      %s254 = sadd.s32 %s252, %s253
      %s255 = smul.addr %s254, 8
      %s256 = scalar_lea.vmem %s0, %s255
      %s257 = smul.u32 16, %s20
      %p258 = scmp.lt.s32.totalorder %s19, 1
      %s259 = scalar_select %p258, %s19, 1
      %s260 = smul.addr %s259, 16
      %s261 = smul.addr %s260, 8
      %s262 = scalar_lea.vmem %s1, %s261
      %s263 = smul.u32 16, %s20
      %p264 = scmp.lt.s32.totalorder %s263, 15
      %s265 = scalar_select %p264, %s263, 15
      %s266 = smul.addr %s265, 8
      %s267 = scalar_lea.vmem %s2, %s266
      %s268 = smul.u32 16, %s20
      %s269 = smul.u32 16, %s20
      %p270 = scmp.lt.s32.totalorder %s19, 1
      %s271 = scalar_select %p270, %s19, 1
      %p272 = scmp.lt.s32.totalorder %s269, 15
      %s273 = scalar_select %p272, %s269, 15
      %s274 = smul.addr %s271, 16
      %s275 = sadd.s32 %s273, %s274
      %s276 = smul.addr %s275, 8
      %s277 = scalar_lea.vmem %s4, %s276
      %s278 = smul.u32 16, %s20
      %v279 = vld [vmem:[%s256] sm:$0xff]
      %v280 = vld [vmem:[%s256 + $0x8] sm:$0xff]
      %v281 = vld [vmem:[%s256 + $0x10] sm:$0xff]
      %v282 = vld [vmem:[%s256 + $0x18] sm:$0xff]
      %v283 = vld [vmem:[%s256 + $0x20] sm:$0xff]
      %v284 = vld [vmem:[%s256 + $0x28] sm:$0xff]
      %v285 = vld [vmem:[%s256 + $0x30] sm:$0xff]
      %v286 = vld [vmem:[%s256 + $0x38] sm:$0xff]
      %v287 = vld [vmem:[%s256 + $0x40] sm:$0xff]
      %v288 = vld [vmem:[%s256 + $0x48] sm:$0xff]
      %v289 = vld [vmem:[%s256 + $0x50] sm:$0xff]
      %v290 = vld [vmem:[%s256 + $0x58] sm:$0xff]
      %v291 = vld [vmem:[%s256 + $0x60] sm:$0xff]
      %v292 = vld [vmem:[%s256 + $0x68] sm:$0xff]
      %v293 = vld [vmem:[%s256 + $0x70] sm:$0xff]
      %v294 = vld [vmem:[%s256 + $0x78] sm:$0xff]
      %v295 = vld [vmem:[%s262] sm:$0xff]
      %v296 = vld [vmem:[%s262 + $0x8] sm:$0xff]
      %v297 = vld [vmem:[%s262 + $0x10] sm:$0xff]
      %v298 = vld [vmem:[%s262 + $0x18] sm:$0xff]
      %v299 = vld [vmem:[%s262 + $0x20] sm:$0xff]
      %v300 = vld [vmem:[%s262 + $0x28] sm:$0xff]
      %v301 = vld [vmem:[%s262 + $0x30] sm:$0xff]
      %v302 = vld [vmem:[%s262 + $0x38] sm:$0xff]
      %v303 = vld [vmem:[%s262 + $0x40] sm:$0xff]
      %v304 = vld [vmem:[%s262 + $0x48] sm:$0xff]
      %v305 = vld [vmem:[%s262 + $0x50] sm:$0xff]
      %v306 = vld [vmem:[%s262 + $0x58] sm:$0xff]
      %v307 = vld [vmem:[%s262 + $0x60] sm:$0xff]
      %v308 = vld [vmem:[%s262 + $0x68] sm:$0xff]
      %v309 = vld [vmem:[%s262 + $0x70] sm:$0xff]
      %v310 = vld [vmem:[%s262 + $0x78] sm:$0xff]
      %vm311 = vcmask 261120
      %v313 = vsel %vm311, %v279, 0
      %v316 = vsel %vm311, %v280, 0
      %v319 = vsel %vm311, %v281, 0
      %v322 = vsel %vm311, %v282, 0
      %v325 = vsel %vm311, %v283, 0
      %v328 = vsel %vm311, %v284, 0
      %v331 = vsel %vm311, %v285, 0
      %v334 = vsel %vm311, %v286, 0
      %v337 = vsel %vm311, %v287, 0
      %v340 = vsel %vm311, %v288, 0
      %v343 = vsel %vm311, %v289, 0
      %v346 = vsel %vm311, %v290, 0
      %v349 = vsel %vm311, %v291, 0
      %v352 = vsel %vm311, %v292, 0
      %v355 = vsel %vm311, %v293, 0
      %v358 = vsel %vm311, %v294, 0
      %v361 = vsel %vm311, %v295, 0
      %v364 = vsel %vm311, %v296, 0
      %v367 = vsel %vm311, %v297, 0
      %v370 = vsel %vm311, %v298, 0
      %v373 = vsel %vm311, %v299, 0
      %v376 = vsel %vm311, %v300, 0
      %v379 = vsel %vm311, %v301, 0
      %v382 = vsel %vm311, %v302, 0
      %v385 = vsel %vm311, %v303, 0
      %v388 = vsel %vm311, %v304, 0
      %v391 = vsel %vm311, %v305, 0
      %v394 = vsel %vm311, %v306, 0
      %v397 = vsel %vm311, %v307, 0
      %v400 = vsel %vm311, %v308, 0
      %v403 = vsel %vm311, %v309, 0
      %v406 = vsel %vm311, %v310, 0
      %408 = vmatprep.subr.mxu0 0.0
      %409 = vmatpush1.xpose.msra.mxu0 %v361
      %410 = vmatprep.subr.mxu0 0.0
      %411 = vmatpush1.xpose.msra.mxu0 %v364
      %412 = vmatprep.subr.mxu0 0.0
      %413 = vmatpush1.xpose.msra.mxu0 %v367
      %414 = vmatprep.subr.mxu0 0.0
      %415 = vmatpush1.xpose.msra.mxu0 %v370
      %416 = vmatprep.subr.mxu0 0.0
      %417 = vmatpush1.xpose.msra.mxu0 %v373
      %418 = vmatprep.subr.mxu0 0.0
      %419 = vmatpush1.xpose.msra.mxu0 %v376
      %420 = vmatprep.subr.mxu0 0.0
      %421 = vmatpush1.xpose.msra.mxu0 %v379
      %422 = vmatprep.subr.mxu0 0.0
      %423 = vmatpush1.xpose.msra.mxu0 %v382
      %424 = vmatprep.subr.mxu0 0.0
      %425 = vmatpush1.xpose.msra.mxu0 %v385
      %426 = vmatprep.subr.mxu0 0.0
      %427 = vmatpush1.xpose.msra.mxu0 %v388
      %428 = vmatprep.subr.mxu0 0.0
      %429 = vmatpush1.xpose.msra.mxu0 %v391
      %430 = vmatprep.subr.mxu0 0.0
      %431 = vmatpush1.xpose.msra.mxu0 %v394
      %432 = vmatprep.subr.mxu0 0.0
      %433 = vmatpush1.xpose.msra.mxu0 %v397
      %434 = vmatprep.subr.mxu0 0.0
      %435 = vmatpush1.xpose.msra.mxu0 %v400
      %436 = vmatprep.subr.mxu0 0.0
      %437 = vmatpush1.xpose.msra.mxu0 %v403
      %438 = vmatprep.subr.mxu0 0.0
      %439 = vmatpush1.xpose.msra.mxu0 %v406
      %440 = vmatprep.subr.mxu0 0.0
      %441 = vmatpush1.xpose.msra.mxu0 0.0
      %442 = vmatprep.subr.mxu0 0.0
      %443 = vmatpush1.xpose.msra.mxu0 0.0
      %444 = vmatprep.subr.mxu0 0.0
      %445 = vmatpush1.xpose.msra.mxu0 0.0
      %446 = vmatprep.subr.mxu0 0.0
      %447 = vmatpush1.xpose.msra.mxu0 0.0
      %448 = vmatprep.subr.mxu0 0.0
      %449 = vmatpush1.xpose.msra.mxu0 0.0
      %450 = vmatprep.subr.mxu0 0.0
      %451 = vmatpush1.xpose.msra.mxu0 0.0
      %452 = vmatprep.subr.mxu0 0.0
      %453 = vmatpush1.xpose.msra.mxu0 0.0
      %454 = vmatprep.subr.mxu0 0.0
      %455 = vmatpush1.xpose.msra.mxu0 0.0
      %456 = vmatprep.subr.mxu0 0.0
      %457 = vmatpush1.xpose.msra.mxu0 0.0
      %458 = vmatprep.subr.mxu0 0.0
      %459 = vmatpush1.xpose.msra.mxu0 0.0
      %460 = vmatprep.subr.mxu0 0.0
      %461 = vmatpush1.xpose.msra.mxu0 0.0
      %462 = vmatprep.subr.mxu0 0.0
      %463 = vmatpush1.xpose.msra.mxu0 0.0
      %464 = vmatprep.subr.mxu0 0.0
      %465 = vmatpush1.xpose.msra.mxu0 0.0
      %466 = vmatprep.subr.mxu0 0.0
      %467 = vmatpush1.xpose.msra.mxu0 0.0
      %468 = vmatprep.subr.mxu0 0.0
      %469 = vmatpush1.xpose.msra.mxu0 0.0
      %470 = vmatprep.subr.mxu0 0.0
      %471 = vmatpush1.xpose.msra.mxu0 0.0
      %472 = vmatprep.mubr.f32.mxu0 0.0
      %473 = vmatmul.mubr.f32.gmra.mrb[0].mxu0 %v313
      %v474 = vpop.f32.mrb[0].mxu0
      %v475 = vadd.f32 0.0, %v474
      %v476 = vpop.f32.mrb[0].mxu0
      %477 = vmatprep.mubr.f32.mxu0 0.0
      %478 = vmatmul.mubr.f32.gmra.mrb[0].mxu0 %v316
      %v479 = vpop.f32.mrb[0].mxu0
      %v480 = vadd.f32 0.0, %v479
      %v481 = vpop.f32.mrb[0].mxu0
      %482 = vmatprep.mubr.f32.mxu0 0.0
      %483 = vmatmul.mubr.f32.gmra.mrb[0].mxu0 %v319
      %v484 = vpop.f32.mrb[0].mxu0
      %v485 = vadd.f32 0.0, %v484
      %v486 = vpop.f32.mrb[0].mxu0
      %487 = vmatprep.mubr.f32.mxu0 0.0
      %488 = vmatmul.mubr.f32.gmra.mrb[0].mxu0 %v322
      %v489 = vpop.f32.mrb[0].mxu0
      %v490 = vadd.f32 0.0, %v489
      %v491 = vpop.f32.mrb[0].mxu0
      %492 = vmatprep.mubr.f32.mxu0 0.0
      %493 = vmatmul.mubr.f32.gmra.mrb[0].mxu0 %v325
      %v494 = vpop.f32.mrb[0].mxu0
      %v495 = vadd.f32 0.0, %v494
      %v496 = vpop.f32.mrb[0].mxu0
      %497 = vmatprep.mubr.f32.mxu0 0.0
      %498 = vmatmul.mubr.f32.gmra.mrb[0].mxu0 %v328
      %v499 = vpop.f32.mrb[0].mxu0
      %v500 = vadd.f32 0.0, %v499
      %v501 = vpop.f32.mrb[0].mxu0
      %502 = vmatprep.mubr.f32.mxu0 0.0
      %503 = vmatmul.mubr.f32.gmra.mrb[0].mxu0 %v331
      %v504 = vpop.f32.mrb[0].mxu0
      %v505 = vadd.f32 0.0, %v504
      %v506 = vpop.f32.mrb[0].mxu0
      %507 = vmatprep.mubr.f32.mxu0 0.0
      %508 = vmatmul.mubr.f32.gmra.mrb[0].mxu0 %v334
      %v509 = vpop.f32.mrb[0].mxu0
      %v510 = vadd.f32 0.0, %v509
      %v511 = vpop.f32.mrb[0].mxu0
      %512 = vmatprep.mubr.f32.mxu0 0.0
      %513 = vmatmul.mubr.f32.gmra.mrb[0].mxu0 %v337
      %v514 = vpop.f32.mrb[0].mxu0
      %v515 = vadd.f32 0.0, %v514
      %v516 = vpop.f32.mrb[0].mxu0
      %517 = vmatprep.mubr.f32.mxu0 0.0
      %518 = vmatmul.mubr.f32.gmra.mrb[0].mxu0 %v340
      %v519 = vpop.f32.mrb[0].mxu0
      %v520 = vadd.f32 0.0, %v519
      %v521 = vpop.f32.mrb[0].mxu0
      %522 = vmatprep.mubr.f32.mxu0 0.0
      %523 = vmatmul.mubr.f32.gmra.mrb[0].mxu0 %v343
      %v524 = vpop.f32.mrb[0].mxu0
      %v525 = vadd.f32 0.0, %v524
      %v526 = vpop.f32.mrb[0].mxu0
      %527 = vmatprep.mubr.f32.mxu0 0.0
      %528 = vmatmul.mubr.f32.gmra.mrb[0].mxu0 %v346
      %v529 = vpop.f32.mrb[0].mxu0
      %v530 = vadd.f32 0.0, %v529
      %v531 = vpop.f32.mrb[0].mxu0
      %532 = vmatprep.mubr.f32.mxu0 0.0
      %533 = vmatmul.mubr.f32.gmra.mrb[0].mxu0 %v349
      %v534 = vpop.f32.mrb[0].mxu0
      %v535 = vadd.f32 0.0, %v534
      %v536 = vpop.f32.mrb[0].mxu0
      %537 = vmatprep.mubr.f32.mxu0 0.0
      %538 = vmatmul.mubr.f32.gmra.mrb[0].mxu0 %v352
      %v539 = vpop.f32.mrb[0].mxu0
      %v540 = vadd.f32 0.0, %v539
      %v541 = vpop.f32.mrb[0].mxu0
      %542 = vmatprep.mubr.f32.mxu0 0.0
      %543 = vmatmul.mubr.f32.gmra.mrb[0].mxu0 %v355
      %v544 = vpop.f32.mrb[0].mxu0
      %v545 = vadd.f32 0.0, %v544
      %v546 = vpop.f32.mrb[0].mxu0
      %547 = vmatprep.mubr.f32.mxu0 0.0
      %548 = vmatmul.mubr.f32.gmra.mrb[0].mxu0 %v358
      %v549 = vpop.f32.mrb[0].mxu0
      %v550 = vadd.f32 0.0, %v549
      %v551 = vpop.f32.mrb[0].mxu0
      %552 = vdwg.mxu0
      %v553 = vmul.f32 %v475, 2.0
      %v554 = vmul.f32 %v480, 2.0
      %v555 = vmul.f32 %v485, 2.0
      %v556 = vmul.f32 %v490, 2.0
      %v557 = vmul.f32 %v495, 2.0
      %v558 = vmul.f32 %v500, 2.0
      %v559 = vmul.f32 %v505, 2.0
      %v560 = vmul.f32 %v510, 2.0
      %v561 = vmul.f32 %v515, 2.0
      %v562 = vmul.f32 %v520, 2.0
      %v563 = vmul.f32 %v525, 2.0
      %v564 = vmul.f32 %v530, 2.0
      %v565 = vmul.f32 %v535, 2.0
      %v566 = vmul.f32 %v540, 2.0
      %v567 = vmul.f32 %v545, 2.0
      %v568 = vmul.f32 %v550, 2.0
      %v569 = vld [vmem:[%s267] sm:$0xff]
      %v570 = vld [vmem:[%s267 + $0x8] sm:$0xff]
      %v571 = vld [vmem:[%s267 + $0x10] sm:$0xff]
      %v572 = vld [vmem:[%s267 + $0x18] sm:$0xff]
      %v573 = vld [vmem:[%s267 + $0x20] sm:$0xff]
      %v574 = vld [vmem:[%s267 + $0x28] sm:$0xff]
      %v575 = vld [vmem:[%s267 + $0x30] sm:$0xff]
      %v576 = vld [vmem:[%s267 + $0x38] sm:$0xff]
      %v577 = vld [vmem:[%s267 + $0x40] sm:$0xff]
      %v578 = vld [vmem:[%s267 + $0x48] sm:$0xff]
      %v579 = vld [vmem:[%s267 + $0x50] sm:$0xff]
      %v580 = vld [vmem:[%s267 + $0x58] sm:$0xff]
      %v581 = vld [vmem:[%s267 + $0x60] sm:$0xff]
      %v582 = vld [vmem:[%s267 + $0x68] sm:$0xff]
      %v583 = vld [vmem:[%s267 + $0x70] sm:$0xff]
      %v584 = vld [vmem:[%s267 + $0x78] sm:$0xff]
      %v585 = vld [vmem:[%s3] sm:$0x3]
      %586 = vset.pattern.permute.xlu0 0
      %587 = vperm.xlu0 %586, %v569
      %v588 = vpop.permute.xlu0 %587
      %589 = vset.pattern.permute.xlu0 0
      %590 = vperm.xlu0 %589, %v570
      %v591 = vpop.permute.xlu0 %590
      %592 = vset.pattern.permute.xlu0 0
      %593 = vperm.xlu0 %592, %v571
      %v594 = vpop.permute.xlu0 %593
      %595 = vset.pattern.permute.xlu0 0
      %596 = vperm.xlu0 %595, %v572
      %v597 = vpop.permute.xlu0 %596
      %598 = vset.pattern.permute.xlu0 0
      %599 = vperm.xlu0 %598, %v573
      %v600 = vpop.permute.xlu0 %599
      %601 = vset.pattern.permute.xlu0 0
      %602 = vperm.xlu0 %601, %v574
      %v603 = vpop.permute.xlu0 %602
      %604 = vset.pattern.permute.xlu0 0
      %605 = vperm.xlu0 %604, %v575
      %v606 = vpop.permute.xlu0 %605
      %607 = vset.pattern.permute.xlu0 0
      %608 = vperm.xlu0 %607, %v576
      %v609 = vpop.permute.xlu0 %608
      %610 = vset.pattern.permute.xlu0 0
      %611 = vperm.xlu0 %610, %v577
      %v612 = vpop.permute.xlu0 %611
      %613 = vset.pattern.permute.xlu0 0
      %614 = vperm.xlu0 %613, %v578
      %v615 = vpop.permute.xlu0 %614
      %616 = vset.pattern.permute.xlu0 0
      %617 = vperm.xlu0 %616, %v579
      %v618 = vpop.permute.xlu0 %617
      %619 = vset.pattern.permute.xlu0 0
      %620 = vperm.xlu0 %619, %v580
      %v621 = vpop.permute.xlu0 %620
      %622 = vset.pattern.permute.xlu0 0
      %623 = vperm.xlu0 %622, %v581
      %v624 = vpop.permute.xlu0 %623
      %625 = vset.pattern.permute.xlu0 0
      %626 = vperm.xlu0 %625, %v582
      %v627 = vpop.permute.xlu0 %626
      %628 = vset.pattern.permute.xlu0 0
      %629 = vperm.xlu0 %628, %v583
      %v630 = vpop.permute.xlu0 %629
      %631 = vset.pattern.permute.xlu0 0
      %632 = vperm.xlu0 %631, %v584
      %v633 = vpop.permute.xlu0 %632
      %v634 = vlaneseq
      %v635 = vshrl.u32 %v634, 7
      %v636 = vsub.s32 0, %v635
      %v637 = vrot.slane %v585, %v636
      %vm638 = vcmp.eq.s32.totalorder %v588, %v637
      %vm639 = vcmp.eq.s32.totalorder %v591, %v637
      %vm640 = vcmp.eq.s32.totalorder %v594, %v637
      %vm641 = vcmp.eq.s32.totalorder %v597, %v637
      %vm642 = vcmp.eq.s32.totalorder %v600, %v637
      %vm643 = vcmp.eq.s32.totalorder %v603, %v637
      %vm644 = vcmp.eq.s32.totalorder %v606, %v637
      %vm645 = vcmp.eq.s32.totalorder %v609, %v637
      %vm646 = vcmp.eq.s32.totalorder %v612, %v637
      %vm647 = vcmp.eq.s32.totalorder %v615, %v637
      %vm648 = vcmp.eq.s32.totalorder %v618, %v637
      %vm649 = vcmp.eq.s32.totalorder %v621, %v637
      %vm650 = vcmp.eq.s32.totalorder %v624, %v637
      %vm651 = vcmp.eq.s32.totalorder %v627, %v637
      %vm652 = vcmp.eq.s32.totalorder %v630, %v637
      %vm653 = vcmp.eq.s32.totalorder %v633, %v637
      %s654 = smul.u32 %s20, 128
      %v655 = vlaneseq
      %v656 = vshrl.u32 %v655, 7
      %v657 = vadd.s32 %v656, 8
      %v658 = vadd.s32 %v656, 16
      %v659 = vadd.s32 %v656, 24
      %v660 = vadd.s32 %v656, 32
      %v661 = vadd.s32 %v656, 40
      %v662 = vadd.s32 %v656, 48
      %v663 = vadd.s32 %v656, 56
      %v664 = vadd.s32 %v656, 64
      %v665 = vadd.s32 %v656, 72
      %v666 = vadd.s32 %v656, 80
      %v667 = vadd.s32 %v656, 88
      %v668 = vadd.s32 %v656, 96
      %v669 = vadd.s32 %v656, 104
      %v670 = vadd.s32 %v656, 112
      %v671 = vadd.s32 %v656, 120
      %v672 = vstv %s654
      %v673 = vadd.s32 %v672, %v656
      %v674 = vadd.s32 %v672, %v657
      %v675 = vadd.s32 %v672, %v658
      %v676 = vadd.s32 %v672, %v659
      %v677 = vadd.s32 %v672, %v660
      %v678 = vadd.s32 %v672, %v661
      %v679 = vadd.s32 %v672, %v662
      %v680 = vadd.s32 %v672, %v663
      %v681 = vadd.s32 %v672, %v664
      %v682 = vadd.s32 %v672, %v665
      %v683 = vadd.s32 %v672, %v666
      %v684 = vadd.s32 %v672, %v667
      %v685 = vadd.s32 %v672, %v668
      %v686 = vadd.s32 %v672, %v669
      %v687 = vadd.s32 %v672, %v670
      %v688 = vadd.s32 %v672, %v671
      %v689 = vlaneseq
      %v690 = vand.u32 %v689, 127
      %vm691 = vcmp.ne.s32.totalorder %v673, %v690
      %vm692 = vcmp.ne.s32.totalorder %v674, %v690
      %vm693 = vcmp.ne.s32.totalorder %v675, %v690
      %vm694 = vcmp.ne.s32.totalorder %v676, %v690
      %vm695 = vcmp.ne.s32.totalorder %v677, %v690
      %vm696 = vcmp.ne.s32.totalorder %v678, %v690
      %vm697 = vcmp.ne.s32.totalorder %v679, %v690
      %vm698 = vcmp.ne.s32.totalorder %v680, %v690
      %vm699 = vcmp.ne.s32.totalorder %v681, %v690
      %vm700 = vcmp.ne.s32.totalorder %v682, %v690
      %vm701 = vcmp.ne.s32.totalorder %v683, %v690
      %vm702 = vcmp.ne.s32.totalorder %v684, %v690
      %vm703 = vcmp.ne.s32.totalorder %v685, %v690
      %vm704 = vcmp.ne.s32.totalorder %v686, %v690
      %vm705 = vcmp.ne.s32.totalorder %v687, %v690
      %vm706 = vcmp.ne.s32.totalorder %v688, %v690
      %vm707 = vmand %vm638, %vm691
      %vm708 = vmand %vm639, %vm692
      %vm709 = vmand %vm640, %vm693
      %vm710 = vmand %vm641, %vm694
      %vm711 = vmand %vm642, %vm695
      %vm712 = vmand %vm643, %vm696
      %vm713 = vmand %vm644, %vm697
      %vm714 = vmand %vm645, %vm698
      %vm715 = vmand %vm646, %vm699
      %vm716 = vmand %vm647, %vm700
      %vm717 = vmand %vm648, %vm701
      %vm718 = vmand %vm649, %vm702
      %vm719 = vmand %vm650, %vm703
      %vm720 = vmand %vm651, %vm704
      %vm721 = vmand %vm652, %vm705
      %vm722 = vmand %vm653, %vm706
      %723 = vset.pattern.permute.xlu0 1
      %724 = vperm.xlu0 %723, %v569
      %v725 = vpop.permute.xlu0 %724
      %726 = vset.pattern.permute.xlu0 1
      %727 = vperm.xlu0 %726, %v570
      %v728 = vpop.permute.xlu0 %727
      %729 = vset.pattern.permute.xlu0 1
      %730 = vperm.xlu0 %729, %v571
      %v731 = vpop.permute.xlu0 %730
      %732 = vset.pattern.permute.xlu0 1
      %733 = vperm.xlu0 %732, %v572
      %v734 = vpop.permute.xlu0 %733
      %735 = vset.pattern.permute.xlu0 1
      %736 = vperm.xlu0 %735, %v573
      %v737 = vpop.permute.xlu0 %736
      %738 = vset.pattern.permute.xlu0 1
      %739 = vperm.xlu0 %738, %v574
      %v740 = vpop.permute.xlu0 %739
      %741 = vset.pattern.permute.xlu0 1
      %742 = vperm.xlu0 %741, %v575
      %v743 = vpop.permute.xlu0 %742
      %744 = vset.pattern.permute.xlu0 1
      %745 = vperm.xlu0 %744, %v576
      %v746 = vpop.permute.xlu0 %745
      %747 = vset.pattern.permute.xlu0 1
      %748 = vperm.xlu0 %747, %v577
      %v749 = vpop.permute.xlu0 %748
      %750 = vset.pattern.permute.xlu0 1
      %751 = vperm.xlu0 %750, %v578
      %v752 = vpop.permute.xlu0 %751
      %753 = vset.pattern.permute.xlu0 1
      %754 = vperm.xlu0 %753, %v579
      %v755 = vpop.permute.xlu0 %754
      %756 = vset.pattern.permute.xlu0 1
      %757 = vperm.xlu0 %756, %v580
      %v758 = vpop.permute.xlu0 %757
      %759 = vset.pattern.permute.xlu0 1
      %760 = vperm.xlu0 %759, %v581
      %v761 = vpop.permute.xlu0 %760
      %762 = vset.pattern.permute.xlu0 1
      %763 = vperm.xlu0 %762, %v582
      %v764 = vpop.permute.xlu0 %763
      %765 = vset.pattern.permute.xlu0 1
      %766 = vperm.xlu0 %765, %v583
      %v767 = vpop.permute.xlu0 %766
      %768 = vset.pattern.permute.xlu0 1
      %769 = vperm.xlu0 %768, %v584
      %v770 = vpop.permute.xlu0 %769
      %v771 = vlaneseq
      %v772 = vshrl.u32 %v771, 7
      %v773 = vsub.s32 1, %v772
      %v774 = vrot.slane %v585, %v773
      %vm775 = vcmp.ne.s32.totalorder %v725, %v774
      %vm776 = vcmp.ne.s32.totalorder %v728, %v774
      %vm777 = vcmp.ne.s32.totalorder %v731, %v774
      %vm778 = vcmp.ne.s32.totalorder %v734, %v774
      %vm779 = vcmp.ne.s32.totalorder %v737, %v774
      %vm780 = vcmp.ne.s32.totalorder %v740, %v774
      %vm781 = vcmp.ne.s32.totalorder %v743, %v774
      %vm782 = vcmp.ne.s32.totalorder %v746, %v774
      %vm783 = vcmp.ne.s32.totalorder %v749, %v774
      %vm784 = vcmp.ne.s32.totalorder %v752, %v774
      %vm785 = vcmp.ne.s32.totalorder %v755, %v774
      %vm786 = vcmp.ne.s32.totalorder %v758, %v774
      %vm787 = vcmp.ne.s32.totalorder %v761, %v774
      %vm788 = vcmp.ne.s32.totalorder %v764, %v774
      %vm789 = vcmp.ne.s32.totalorder %v767, %v774
      %vm790 = vcmp.ne.s32.totalorder %v770, %v774
      %vm791 = vmand %vm638, %vm775
      %vm792 = vmand %vm639, %vm776
      %vm793 = vmand %vm640, %vm777
      %vm794 = vmand %vm641, %vm778
      %vm795 = vmand %vm642, %vm779
      %vm796 = vmand %vm643, %vm780
      %vm797 = vmand %vm644, %vm781
      %vm798 = vmand %vm645, %vm782
      %vm799 = vmand %vm646, %vm783
      %vm800 = vmand %vm647, %vm784
      %vm801 = vmand %vm648, %vm785
      %vm802 = vmand %vm649, %vm786
      %vm803 = vmand %vm650, %vm787
      %vm804 = vmand %vm651, %vm788
      %vm805 = vmand %vm652, %vm789
      %vm806 = vmand %vm653, %vm790
      %807 = vmax.xlane.f32.xlu0 %v553
      %v808 = vpop.xlane.xlu0 %807
      %809 = vmax.xlane.f32.xlu0 %v554
      %v810 = vpop.xlane.xlu0 %809
      %811 = vmax.xlane.f32.xlu0 %v555
      %v812 = vpop.xlane.xlu0 %811
      %813 = vmax.xlane.f32.xlu0 %v556
      %v814 = vpop.xlane.xlu0 %813
      %815 = vmax.xlane.f32.xlu0 %v557
      %v816 = vpop.xlane.xlu0 %815
      %817 = vmax.xlane.f32.xlu0 %v558
      %v818 = vpop.xlane.xlu0 %817
      %819 = vmax.xlane.f32.xlu0 %v559
      %v820 = vpop.xlane.xlu0 %819
      %821 = vmax.xlane.f32.xlu0 %v560
      %v822 = vpop.xlane.xlu0 %821
      %823 = vmax.xlane.f32.xlu0 %v561
      %v824 = vpop.xlane.xlu0 %823
      %825 = vmax.xlane.f32.xlu0 %v562
      %v826 = vpop.xlane.xlu0 %825
      %827 = vmax.xlane.f32.xlu0 %v563
      %v828 = vpop.xlane.xlu0 %827
      %829 = vmax.xlane.f32.xlu0 %v564
      %v830 = vpop.xlane.xlu0 %829
      %831 = vmax.xlane.f32.xlu0 %v565
      %v832 = vpop.xlane.xlu0 %831
      %833 = vmax.xlane.f32.xlu0 %v566
      %v834 = vpop.xlane.xlu0 %833
      %835 = vmax.xlane.f32.xlu0 %v567
      %v836 = vpop.xlane.xlu0 %835
      %837 = vmax.xlane.f32.xlu0 %v568
      %v838 = vpop.xlane.xlu0 %837
      %v839 = vsub.f32 %v553, %v808
      %v840 = vsub.f32 %v554, %v810
      %v841 = vsub.f32 %v555, %v812
      %v842 = vsub.f32 %v556, %v814
      %v843 = vsub.f32 %v557, %v816
      %v844 = vsub.f32 %v558, %v818
      %v845 = vsub.f32 %v559, %v820
      %v846 = vsub.f32 %v560, %v822
      %v847 = vsub.f32 %v561, %v824
      %v848 = vsub.f32 %v562, %v826
      %v849 = vsub.f32 %v563, %v828
      %v850 = vsub.f32 %v564, %v830
      %v851 = vsub.f32 %v565, %v832
      %v852 = vsub.f32 %v566, %v834
      %v853 = vsub.f32 %v567, %v836
      %v854 = vsub.f32 %v568, %v838
      %v855 = vmul.f32 %v839, 1.442695
      %v856 = vpow.pop %v855
      %v857 = vmul.f32 %v840, 1.442695
      %v858 = vpow.pop %v857
      %v859 = vmul.f32 %v841, 1.442695
      %v860 = vpow.pop %v859
      %v861 = vmul.f32 %v842, 1.442695
      %v862 = vpow.pop %v861
      %v863 = vmul.f32 %v843, 1.442695
      %v864 = vpow.pop %v863
      %v865 = vmul.f32 %v844, 1.442695
      %v866 = vpow.pop %v865
      %v867 = vmul.f32 %v845, 1.442695
      %v868 = vpow.pop %v867
      %v869 = vmul.f32 %v846, 1.442695
      %v870 = vpow.pop %v869
      %v871 = vmul.f32 %v847, 1.442695
      %v872 = vpow.pop %v871
      %v873 = vmul.f32 %v848, 1.442695
      %v874 = vpow.pop %v873
      %v875 = vmul.f32 %v849, 1.442695
      %v876 = vpow.pop %v875
      %v877 = vmul.f32 %v850, 1.442695
      %v878 = vpow.pop %v877
      %v879 = vmul.f32 %v851, 1.442695
      %v880 = vpow.pop %v879
      %v881 = vmul.f32 %v852, 1.442695
      %v882 = vpow.pop %v881
      %v883 = vmul.f32 %v853, 1.442695
      %v884 = vpow.pop %v883
      %v885 = vmul.f32 %v854, 1.442695
      %v886 = vpow.pop %v885
      %v887 = vsel %vm791, %v856, 0.0
      %v888 = vsel %vm792, %v858, 0.0
      %v889 = vsel %vm793, %v860, 0.0
      %v890 = vsel %vm794, %v862, 0.0
      %v891 = vsel %vm795, %v864, 0.0
      %v892 = vsel %vm796, %v866, 0.0
      %v893 = vsel %vm797, %v868, 0.0
      %v894 = vsel %vm798, %v870, 0.0
      %v895 = vsel %vm799, %v872, 0.0
      %v896 = vsel %vm800, %v874, 0.0
      %v897 = vsel %vm801, %v876, 0.0
      %v898 = vsel %vm802, %v878, 0.0
      %v899 = vsel %vm803, %v880, 0.0
      %v900 = vsel %vm804, %v882, 0.0
      %v901 = vsel %vm805, %v884, 0.0
      %v902 = vsel %vm806, %v886, 0.0
      %903 = vadd.xlane.f32.xlu0 %v887
      %v904 = vpop.xlane.xlu0 %903
      %905 = vadd.xlane.f32.xlu0 %v888
      %v906 = vpop.xlane.xlu0 %905
      %907 = vadd.xlane.f32.xlu0 %v889
      %v908 = vpop.xlane.xlu0 %907
      %909 = vadd.xlane.f32.xlu0 %v890
      %v910 = vpop.xlane.xlu0 %909
      %911 = vadd.xlane.f32.xlu0 %v891
      %v912 = vpop.xlane.xlu0 %911
      %913 = vadd.xlane.f32.xlu0 %v892
      %v914 = vpop.xlane.xlu0 %913
      %915 = vadd.xlane.f32.xlu0 %v893
      %v916 = vpop.xlane.xlu0 %915
      %917 = vadd.xlane.f32.xlu0 %v894
      %v918 = vpop.xlane.xlu0 %917
      %919 = vadd.xlane.f32.xlu0 %v895
      %v920 = vpop.xlane.xlu0 %919
      %921 = vadd.xlane.f32.xlu0 %v896
      %v922 = vpop.xlane.xlu0 %921
      %923 = vadd.xlane.f32.xlu0 %v897
      %v924 = vpop.xlane.xlu0 %923
      %925 = vadd.xlane.f32.xlu0 %v898
      %v926 = vpop.xlane.xlu0 %925
      %927 = vadd.xlane.f32.xlu0 %v899
      %v928 = vpop.xlane.xlu0 %927
      %929 = vadd.xlane.f32.xlu0 %v900
      %v930 = vpop.xlane.xlu0 %929
      %931 = vadd.xlane.f32.xlu0 %v901
      %v932 = vpop.xlane.xlu0 %931
      %933 = vadd.xlane.f32.xlu0 %v902
      %v934 = vpop.xlane.xlu0 %933
      %v935 = vadd.f32 %v856, %v904
      %v936 = vadd.f32 %v858, %v906
      %v937 = vadd.f32 %v860, %v908
      %v938 = vadd.f32 %v862, %v910
      %v939 = vadd.f32 %v864, %v912
      %v940 = vadd.f32 %v866, %v914
      %v941 = vadd.f32 %v868, %v916
      %v942 = vadd.f32 %v870, %v918
      %v943 = vadd.f32 %v872, %v920
      %v944 = vadd.f32 %v874, %v922
      %v945 = vadd.f32 %v876, %v924
      %v946 = vadd.f32 %v878, %v926
      %v947 = vadd.f32 %v880, %v928
      %v948 = vadd.f32 %v882, %v930
      %v949 = vadd.f32 %v884, %v932
      %v950 = vadd.f32 %v886, %v934
      %v951 = vlog2.pop %v935
      %v952 = vmul.f32 %v951, 0.6931472
      %v953 = vlog2.pop %v936
      %v954 = vmul.f32 %v953, 0.6931472
      %v955 = vlog2.pop %v937
      %v956 = vmul.f32 %v955, 0.6931472
      %v957 = vlog2.pop %v938
      %v958 = vmul.f32 %v957, 0.6931472
      %v959 = vlog2.pop %v939
      %v960 = vmul.f32 %v959, 0.6931472
      %v961 = vlog2.pop %v940
      %v962 = vmul.f32 %v961, 0.6931472
      %v963 = vlog2.pop %v941
      %v964 = vmul.f32 %v963, 0.6931472
      %v965 = vlog2.pop %v942
      %v966 = vmul.f32 %v965, 0.6931472
      %v967 = vlog2.pop %v943
      %v968 = vmul.f32 %v967, 0.6931472
      %v969 = vlog2.pop %v944
      %v970 = vmul.f32 %v969, 0.6931472
      %v971 = vlog2.pop %v945
      %v972 = vmul.f32 %v971, 0.6931472
      %v973 = vlog2.pop %v946
      %v974 = vmul.f32 %v973, 0.6931472
      %v975 = vlog2.pop %v947
      %v976 = vmul.f32 %v975, 0.6931472
      %v977 = vlog2.pop %v948
      %v978 = vmul.f32 %v977, 0.6931472
      %v979 = vlog2.pop %v949
      %v980 = vmul.f32 %v979, 0.6931472
      %v981 = vlog2.pop %v950
      %v982 = vmul.f32 %v981, 0.6931472
      %v983 = vsub.f32 %v952, %v839
      %v984 = vsub.f32 %v954, %v840
      %v985 = vsub.f32 %v956, %v841
      %v986 = vsub.f32 %v958, %v842
      %v987 = vsub.f32 %v960, %v843
      %v988 = vsub.f32 %v962, %v844
      %v989 = vsub.f32 %v964, %v845
      %v990 = vsub.f32 %v966, %v846
      %v991 = vsub.f32 %v968, %v847
      %v992 = vsub.f32 %v970, %v848
      %v993 = vsub.f32 %v972, %v849
      %v994 = vsub.f32 %v974, %v850
      %v995 = vsub.f32 %v976, %v851
      %v996 = vsub.f32 %v978, %v852
      %v997 = vsub.f32 %v980, %v853
      %v998 = vsub.f32 %v982, %v854
      %v999 = vsel %vm707, %v983, 0.0
      %v1000 = vsel %vm708, %v984, 0.0
      %v1001 = vsel %vm709, %v985, 0.0
      %v1002 = vsel %vm710, %v986, 0.0
      %v1003 = vsel %vm711, %v987, 0.0
      %v1004 = vsel %vm712, %v988, 0.0
      %v1005 = vsel %vm713, %v989, 0.0
      %v1006 = vsel %vm714, %v990, 0.0
      %v1007 = vsel %vm715, %v991, 0.0
      %v1008 = vsel %vm716, %v992, 0.0
      %v1009 = vsel %vm717, %v993, 0.0
      %v1010 = vsel %vm718, %v994, 0.0
      %v1011 = vsel %vm719, %v995, 0.0
      %v1012 = vsel %vm720, %v996, 0.0
      %v1013 = vsel %vm721, %v997, 0.0
      %v1014 = vsel %vm722, %v998, 0.0
      %1015 = vadd.xlane.f32.xlu0 %v999
      %v1016 = vpop.xlane.xlu0 %1015
      %1017 = vadd.xlane.f32.xlu0 %v1000
      %v1018 = vpop.xlane.xlu0 %1017
      %1019 = vadd.xlane.f32.xlu0 %v1001
      %v1020 = vpop.xlane.xlu0 %1019
      %1021 = vadd.xlane.f32.xlu0 %v1002
      %v1022 = vpop.xlane.xlu0 %1021
      %1023 = vadd.xlane.f32.xlu0 %v1003
      %v1024 = vpop.xlane.xlu0 %1023
      %1025 = vadd.xlane.f32.xlu0 %v1004
      %v1026 = vpop.xlane.xlu0 %1025
      %1027 = vadd.xlane.f32.xlu0 %v1005
      %v1028 = vpop.xlane.xlu0 %1027
      %1029 = vadd.xlane.f32.xlu0 %v1006
      %v1030 = vpop.xlane.xlu0 %1029
      %1031 = vadd.xlane.f32.xlu0 %v1007
      %v1032 = vpop.xlane.xlu0 %1031
      %1033 = vadd.xlane.f32.xlu0 %v1008
      %v1034 = vpop.xlane.xlu0 %1033
      %1035 = vadd.xlane.f32.xlu0 %v1009
      %v1036 = vpop.xlane.xlu0 %1035
      %1037 = vadd.xlane.f32.xlu0 %v1010
      %v1038 = vpop.xlane.xlu0 %1037
      %1039 = vadd.xlane.f32.xlu0 %v1011
      %v1040 = vpop.xlane.xlu0 %1039
      %1041 = vadd.xlane.f32.xlu0 %v1012
      %v1042 = vpop.xlane.xlu0 %1041
      %1043 = vadd.xlane.f32.xlu0 %v1013
      %v1044 = vpop.xlane.xlu0 %1043
      %1045 = vadd.xlane.f32.xlu0 %v1014
      %v1046 = vpop.xlane.xlu0 %1045
      %vm1047 = vcmask 7168
      %1048 = vst.msk [vmem:[%s277] sm:$0xff] %vm1047, %v1016
      %1049 = vst.msk [vmem:[%s277 + $0x8] sm:$0xff] %vm1047, %v1018
      %1050 = vst.msk [vmem:[%s277 + $0x10] sm:$0xff] %vm1047, %v1020
      %1051 = vst.msk [vmem:[%s277 + $0x18] sm:$0xff] %vm1047, %v1022
      %1052 = vst.msk [vmem:[%s277 + $0x20] sm:$0xff] %vm1047, %v1024
      %1053 = vst.msk [vmem:[%s277 + $0x28] sm:$0xff] %vm1047, %v1026
      %1054 = vst.msk [vmem:[%s277 + $0x30] sm:$0xff] %vm1047, %v1028
      %1055 = vst.msk [vmem:[%s277 + $0x38] sm:$0xff] %vm1047, %v1030
      %1056 = vst.msk [vmem:[%s277 + $0x40] sm:$0xff] %vm1047, %v1032
      %1057 = vst.msk [vmem:[%s277 + $0x48] sm:$0xff] %vm1047, %v1034
      %1058 = vst.msk [vmem:[%s277 + $0x50] sm:$0xff] %vm1047, %v1036
      %1059 = vst.msk [vmem:[%s277 + $0x58] sm:$0xff] %vm1047, %v1038
      %1060 = vst.msk [vmem:[%s277 + $0x60] sm:$0xff] %vm1047, %v1040
      %1061 = vst.msk [vmem:[%s277 + $0x68] sm:$0xff] %vm1047, %v1042
      %1062 = vst.msk [vmem:[%s277 + $0x70] sm:$0xff] %vm1047, %v1044
      %1063 = vst.msk [vmem:[%s277 + $0x78] sm:$0xff] %vm1047, %v1046
      %s1064 = smul.u32 16, %s20
      %p1065 = scmp.lt.s32.totalorder %s19, 1
      %s1066 = scalar_select %p1065, %s19, 1
      %p1067 = scmp.lt.s32.totalorder %s1064, 15
      %s1068 = scalar_select %p1067, %s1064, 15
      %s1069 = smul.addr %s1066, 16
      %s1070 = sadd.s32 %s1068, %s1069
      %s1071 = smul.addr %s1070, 8
      %s1072 = scalar_lea.vmem %s4, %s1071
      // Predicated region
      $region37: #{tpu_custom_call.1} parent=35 // pred_check
        %p1073 = pneg %p148
      $region38: #{tpu_custom_call.1} parent=35 // pred_check_branch
        %1075 = sbr.rel (%p1073) target = $region40
      $region39: #{tpu_custom_call.1} parent=35 // pred_region
        %s1076 = smul.u32 16, %s20
      $region40: #{tpu_custom_call.1} parent=35 // pred_fallthru
        _
    $region36: #{tpu_custom_call.1} parent=5 // pred_fallthru
      _
    %p1077 = scmp.le.s32.totalorder 2, %s10
    // Predicated region
    $region41: #{tpu_custom_call.1} parent=5 // pred_check
      %p1078 = pneg %p1077
    $region42: #{tpu_custom_call.1} parent=5 // pred_check_branch
      %1080 = sbr.rel (%p1078) target = $region44
    $region43: #{tpu_custom_call.1} parent=5 // pred_region
      %s1081 = ssub.s32 %s10, 2
      // Predicated region
      $region45: #{tpu_custom_call.1} parent=43 // pred_check
        %p1082 = pneg %p154
      $region46: #{tpu_custom_call.1} parent=43 // pred_check_branch
        %1084 = sbr.rel (%p1082) target = $region48
      $region47: #{tpu_custom_call.1} parent=43 // pred_region
        %s1085 = smul.u32 16, %s22
        %p1086 = scmp.lt.s32.totalorder %s21, 1
        %s1087 = scalar_select %p1086, %s21, 1
        %p1088 = scmp.lt.s32.totalorder %s1085, 15
        %s1089 = scalar_select %p1088, %s1085, 15
        %s1090 = smul.addr %s1087, 16
        %s1091 = sadd.s32 %s1089, %s1090
        %s1092 = smul.addr %s1091, 8
        %s1093 = scalar_lea.vmem %s4, %s1092
      $region48: #{tpu_custom_call.1} parent=43 // pred_fallthru
        _
    $region44: #{tpu_custom_call.1} parent=5 // pred_fallthru
      _
  $region6: #{tpu_custom_call.1} parent=0 // loop_footer
    %s14 = sadd.s32 1, %s10
  $region7: #{tpu_custom_call.1} parent=0 // loop_footer_branch
    %9 = sbr.rel target = $region3
  $region8: #{tpu_custom_call.1} parent=0 // loop_exit
    _

</llo_original>
